<compile_context>
chip_gen: v7x
topology: tpu7x:2x2x1
jax: 0.10.0
libtpu: 0.0.40
codegen_flags: <defaults>
</compile_context>

<pallas_src>
import jax
import jax.numpy as jnp
from jax.experimental import pallas as pl
from jax.experimental.pallas import tpu as pltpu

EPSILON2 = 0.001
T1 = 1000.0   # self.t1
T2 = 1000.0   # self.t2 (== t1, so the loss softmax and argmax softmax coincide)


def _make_kernel(V, Bt, B_true, need_batch_mask):
    """Kernel for one (Bt, Ft) block; feature axis on lanes, V is a static loop."""

    def kernel(x_ref, c_ref, onehot_ref, loss_ref):
        b = pl.program_id(1)          # batch grid axis (inner, "arbitrary" / reduction)

        @pl.when(b == 0)
        def _():                       # fresh accumulator per feature block
            loss_ref[...] = jnp.zeros_like(loss_ref)

        x = x_ref[...]                 # (Bt, Ft) f32
        c = c_ref[...]                 # (V, Ft)  f32 -- hoisted single load

        # Squared distance to each interval center; V tiny -> static loop,
        # every slab is a lane-dense (Bt, Ft) array (pure VPU work).
        d = [(x - c[v:v + 1, :]) ** 2 for v in range(V)]

        # Fused min/argmin scan.  exp(-t*(d - dmin)) is monotone decreasing in d,
        # so argmax of the t2-softmax == argmin of d; strict '<' keeps the first
        # index on ties, matching torch's argmax-of-softmax behavior.
        d_min = d[0]
        arg = jnp.zeros(x.shape, dtype=jnp.int32)
        for v in range(1, V):
            take = d[v] < d_min
            d_min = jnp.where(take, d[v], d_min)
            arg = jnp.where(take, jnp.int32(v), arg)

        # Forward value of X_b.detach() + X_softmax - X_softmax.detach() == one-hot.
        # Stored as bf16 (0/1 exact) to halve output HBM traffic.
        for v in range(V):
            onehot_ref[v, :, :] = (arg == v).astype(onehot_ref.dtype)

        # kmeans residual per (b, f): sum_v D * softmax_v(-t1*(D - Dmin)).
        e = [jnp.exp(-T1 * (dv - d_min)) for dv in d]          # EUP work
        num = d[0] * e[0]
        den = e[0]
        for v in range(1, V):
            num = num + d[v] * e[v]
            den = den + e[v]
        # den >= 1 (the argmin term contributes exp(0) = 1): approx EUP reciprocal
        # is safe; one Newton step keeps ~f32 accuracy while avoiding the divide.
        r = pl.reciprocal(den, approx=True)
        r = r * (2.0 - den * r)
        contrib = num * r                                       # (Bt, Ft)

        if need_batch_mask:            # static Python flag: only when B was padded
            rows = jax.lax.broadcasted_iota(jnp.int32, contrib.shape, 0) + b * Bt
            contrib = jnp.where(rows < B_true, contrib, 0.0)

        # Batch (sublane) partial reduction inside the kernel -- XLU slot, otherwise
        # idle -- accumulated across the batch grid axis into a (1, Ft) row.
        loss_ref[...] += jnp.sum(contrib, axis=0, keepdims=True)

    return kernel


def _round_up(n, q):
    return ((n + q - 1) // q) * q


def _tile_and_pad(n, requested, quantum):
    """Pick a tile that is a multiple of `quantum` (or the full dim when small) and
    the padded extent it divides.  Never falls back to an unbounded full-dim block."""
    if n <= quantum:
        return n, n                                 # full-dim block (allowed by BlockSpec)
    n_pad = _round_up(n, quantum)
    t = max(quantum, (min(requested, n_pad) // quantum) * quantum)
    while n_pad % t != 0:                           # terminates: quantum always divides n_pad
        t -= quantum
    return t, n_pad


def binarize_forward(x, interval, i_min, *, bin_t, time_series_length,
                     block_b=128, block_f=512, interleave_output=True):
    """BinarizeLayer.forward.  x: (B, input_dim) f32.

    Returns (total_out, kmeans_loss).
      interleave_output=True : total_out is (B, input_dim*V) bf16 in the torch concat
                               order (feature-major, interval-minor); needs one XLA
                               relayout of the one-hot tensor.
      interleave_output=False: total_out is the kernel-native (V, B, input_dim) bf16
                               layout (cheapest: fold the permutation into the consumer).
    Defaults (128, 512) fit v5e's 16 MiB scoped-VMEM default; on v6e/v7x pass
    block_f=1024 (or block_b=256) to further amortize per-grid-step overhead.
    """
    B, F = x.shape
    V = interval.shape[1]
    x = x.astype(jnp.float32)

    # --- parameter-only preprocessing (tiny, no batch dimension) ---
    interval_pos = jnp.where(interval > EPSILON2, interval,
                             jnp.full_like(interval, EPSILON2))       # Enforced fwd
    ts = 3 * time_series_length
    feat = jnp.arange(F)
    grp = jnp.where(feat < ts, feat // bin_t, feat - ts + ts // bin_t)
    centers = (i_min.astype(jnp.float32)[:, None]
               + jnp.cumsum(interval_pos[grp].astype(jnp.float32), axis=1))  # (F, V)
    centers_vf = centers.T                                             # (V, F), lane-dense on F

    # --- tiling (padded so the tile never silently grows to the full dimension) ---
    Bt, B_pad = _tile_and_pad(B, block_b, 16)     # 16: bf16 sublane quantum for the output
    Ft, F_pad = _tile_and_pad(F, block_f, 128)
    if F_pad != F:
        # Zero-padded feature columns have d == 0 for every interval, so they add
        # exactly 0 to the kmeans loss: no masking needed along the feature axis.
        x = jnp.pad(x, ((0, 0), (0, F_pad - F)))
        centers_vf = jnp.pad(centers_vf, ((0, 0), (0, F_pad - F)))
    if B_pad != B:
        x = jnp.pad(x, ((0, B_pad - B), (0, 0)))
    grid = (F_pad // Ft, B_pad // Bt)             # batch (loss-reduction axis) last

    kernel = _make_kernel(V, Bt, B, need_batch_mask=(B_pad != B))

    onehot_vbf, loss_row = pl.pallas_call(
        kernel,
        out_shape=(jax.ShapeDtypeStruct((V, B_pad, F_pad), jnp.bfloat16),
                   jax.ShapeDtypeStruct((1, F_pad), jnp.float32)),
        grid=grid,
        in_specs=[pl.BlockSpec((Bt, Ft), lambda f, b: (b, f)),
                  pl.BlockSpec((V, Ft), lambda f, b: (0, f))],
        # onehot streams out per step; loss block stays resident across the batch
        # axis (accumulator).  If xprof shows exposed one-hot writeback on v6e,
        # sweep pipeline_mode=pl.Buffered(3) on the first out_spec.
        out_specs=(pl.BlockSpec((V, Bt, Ft), lambda f, b: (0, b, f)),
                   pl.BlockSpec((1, Ft), lambda f, b: (0, f))),
        compiler_params=pltpu.CompilerParams(
            dimension_semantics=("parallel", "arbitrary"),
            vmem_limit_bytes=48 * 1024 * 1024),
        cost_estimate=pl.CostEstimate(
            flops=int(12 * V * B_pad * F_pad),
            transcendentals=int((V + 1) * B_pad * F_pad),
            bytes_accessed=int(4 * B_pad * F_pad + 2 * V * B_pad * F_pad
                               + 4 * V * F_pad + 4 * F_pad)),
    )(x, centers_vf)

    # per-feature batch sums -> batch mean -> sum over features
    kmeans_loss = jnp.sum(loss_row[0, :F]) / B

    onehot_vbf = onehot_vbf[:, :B, :F]
    if interleave_output:
        # TODO(synk): per the perf review the cheapest option is to keep the
        # (V, B, F) layout and fold this permutation into the downstream consumer;
        # the relayout is retained here (now on bf16, half the old traffic) only to
        # reproduce the exact torch concat order.
        total_out = onehot_vbf.transpose(1, 2, 0).reshape(B, F * V)
    else:
        total_out = onehot_vbf
    return total_out, kmeans_loss


def binarize_ref(x, interval, i_min, *, bin_t, time_series_length):
    """Pure-JAX reference mirroring the PyTorch loop structure."""
    interval_pos = jnp.where(interval > EPSILON2, interval,
                             jnp.full_like(interval, EPSILON2))
    B, F = x.shape
    V = interval.shape[1]
    ts = 3 * time_series_length
    outs = []
    kmeans_loss = jnp.float32(0.0)
    for fea in range(F):
        xf = x[:, fea]
        if fea < ts:
            iv = interval_pos[fea // bin_t]
        else:
            iv = interval_pos[fea + ts // bin_t - ts]
        start = i_min[fea]
        cols = []
        for v in range(V):
            start = start + iv[v]
            cols.append((xf - start) ** 2)
        D = jnp.stack(cols, axis=1)                           # (B, V)
        Dmin = jnp.min(D, axis=1, keepdims=True)
        De = jnp.exp(-T1 * (D - Dmin))
        Ds = De / jnp.sum(De, axis=1, keepdims=True)
        kmeans_loss = kmeans_loss + jnp.mean(jnp.sum(D * Ds, axis=1))
        Xe = jnp.exp(-T2 * (D - Dmin))
        Xs = Xe / jnp.sum(Xe, axis=1, keepdims=True)
        arg = jnp.argmax(Xs, axis=1)
        outs.append(jax.nn.one_hot(arg, V, dtype=jnp.float32))
    return jnp.concatenate(outs, axis=1), kmeans_loss


if __name__ == "__main__":
    # Small shapes consistent with the module:
    #   8 time steps x 3 time-series channels (24 features, grouped by bin_t=4)
    #   + 8 static features, 5 intervals per group, batch 24.
    time_series_length = 8
    bin_t = 4
    n_static = 8
    input_dim = 3 * time_series_length + n_static               # 32 features
    interval_number = 5
    num_groups = (3 * time_series_length) // bin_t + n_static   # 14 interval rows
    B = 24   # deliberately NOT a multiple of the 16-row tile -> exercises pad + mask

    key = jax.random.PRNGKey(0)
    kx, ki, km = jax.random.split(key, 3)
    x = jax.random.normal(kx, (B, input_dim), dtype=jnp.float32)
    interval = 0.5 * jax.random.uniform(ki, (num_groups, interval_number),
                                        dtype=jnp.float32)
    i_min = -1.5 + 0.1 * jax.random.uniform(km, (input_dim,), dtype=jnp.float32)

    # block_b=16 so this tiny demo runs a multi-step grid (grid=(1, 2)) and
    # exercises the in-kernel batch accumulation of the loss.
    total_out, kmeans_loss = binarize_forward(
        x, interval, i_min, bin_t=bin_t, time_series_length=time_series_length,
        block_b=16)
    total_out = jax.block_until_ready(total_out)
    kmeans_loss = jax.block_until_ready(kmeans_loss)

    ref_out, ref_loss = binarize_ref(
        x, interval, i_min, bin_t=bin_t, time_series_length=time_series_length)
    assert total_out.shape == (B, input_dim * interval_number), total_out.shape
    assert jnp.allclose(total_out.astype(jnp.float32), ref_out, atol=1e-6)
    assert jnp.allclose(kmeans_loss, ref_loss, rtol=1e-4, atol=1e-5), (
        kmeans_loss, ref_loss)
    print("KERNEL_OK")
</pallas_src>

<mosaic_0001>
module attributes {stable_mosaic.version = 11 : i64} {
  func.func @kernel(%arg0: i32, %arg1: i32, %arg2: memref<16x32xf32, #tpu.memory_space<vmem>>, %arg3: memref<5x32xf32, #tpu.memory_space<vmem>>, %arg4: memref<5x16x32xbf16, #tpu.memory_space<vmem>>, %arg5: memref<1x32xf32, #tpu.memory_space<vmem>>) attributes {dimension_semantics = [#tpu.dimension_semantics<parallel>, #tpu.dimension_semantics<arbitrary>], iteration_bounds = array<i64: 1, 2>, scalar_prefetch = 0 : i64, scratch_operands = 0 : i64, tpu.core_type = #tpu.core_type<tc>, window_params = [{transform_indices = @transform_0, window_bounds = array<i64: 16, 32>}, {transform_indices = @transform_1, window_bounds = array<i64: 5, 32>}, {transform_indices = @transform_2, window_bounds = array<i64: 5, 16, 32>}, {transform_indices = @transform_3, window_bounds = array<i64: 1, 32>}]} {
    %c0_i32 = arith.constant 0 : i32
    %0 = arith.cmpi eq, %arg1, %c0_i32 : i32
    %1 = arith.extui %0 : i1 to i32
    %c0_i32_0 = arith.constant 0 : i32
    %2 = arith.cmpi ne, %1, %c0_i32_0 : i32
    scf.if %2 {
      %cst_32 = arith.constant 0.000000e+00 : f32
      %134 = vector.broadcast %cst_32 : f32 to vector<1x32xf32>
      %c0_33 = arith.constant 0 : index
      %c0_34 = arith.constant 0 : index
      %135 = vector.load %arg5[%c0_33, %c0_34] : memref<1x32xf32, #tpu.memory_space<vmem>>, vector<1x32xf32>
      tpu.vector_store %arg5[%c0_33, %c0_34], %134 {strides = array<i32>} : memref<1x32xf32, #tpu.memory_space<vmem>>, vector<1x32xf32>,
    } else {
    }
    %c0 = arith.constant 0 : index
    %c0_1 = arith.constant 0 : index
    %3 = vector.load %arg2[%c0, %c0_1] : memref<16x32xf32, #tpu.memory_space<vmem>>, vector<16x32xf32>
    %c0_2 = arith.constant 0 : index
    %c0_3 = arith.constant 0 : index
    %4 = vector.load %arg3[%c0_2, %c0_3] : memref<5x32xf32, #tpu.memory_space<vmem>>, vector<5x32xf32>
    %5 = vector.extract_strided_slice %4 {offsets = [0, 0], sizes = [1, 32], strides = [1, 1]} : vector<5x32xf32> to vector<1x32xf32>
    %6 = vector.broadcast %5 : vector<1x32xf32> to vector<16x32xf32>
    %7 = arith.subf %3, %6 : vector<16x32xf32>
    %8 = arith.mulf %7, %7 : vector<16x32xf32>
    %9 = vector.extract_strided_slice %4 {offsets = [1, 0], sizes = [1, 32], strides = [1, 1]} : vector<5x32xf32> to vector<1x32xf32>
    %10 = vector.broadcast %9 : vector<1x32xf32> to vector<16x32xf32>
    %11 = arith.subf %3, %10 : vector<16x32xf32>
    %12 = arith.mulf %11, %11 : vector<16x32xf32>
    %13 = vector.extract_strided_slice %4 {offsets = [2, 0], sizes = [1, 32], strides = [1, 1]} : vector<5x32xf32> to vector<1x32xf32>
    %14 = vector.broadcast %13 : vector<1x32xf32> to vector<16x32xf32>
    %15 = arith.subf %3, %14 : vector<16x32xf32>
    %16 = arith.mulf %15, %15 : vector<16x32xf32>
    %17 = vector.extract_strided_slice %4 {offsets = [3, 0], sizes = [1, 32], strides = [1, 1]} : vector<5x32xf32> to vector<1x32xf32>
    %18 = vector.broadcast %17 : vector<1x32xf32> to vector<16x32xf32>
    %19 = arith.subf %3, %18 : vector<16x32xf32>
    %20 = arith.mulf %19, %19 : vector<16x32xf32>
    %21 = vector.extract_strided_slice %4 {offsets = [4, 0], sizes = [1, 32], strides = [1, 1]} : vector<5x32xf32> to vector<1x32xf32>
    %22 = vector.broadcast %21 : vector<1x32xf32> to vector<16x32xf32>
    %23 = arith.subf %3, %22 : vector<16x32xf32>
    %24 = arith.mulf %23, %23 : vector<16x32xf32>
    %c0_i32_4 = arith.constant 0 : i32
    %25 = vector.broadcast %c0_i32_4 : i32 to vector<16x32xi32>
    %26 = arith.cmpf olt, %12, %8 : vector<16x32xf32>
    %27 = arith.select %26, %12, %8 : vector<16x32xi1>, vector<16x32xf32>
    %c1_i32 = arith.constant 1 : i32
    %28 = vector.broadcast %c1_i32 : i32 to vector<16x32xi32>
    %29 = arith.select %26, %28, %25 : vector<16x32xi1>, vector<16x32xi32>
    %30 = arith.cmpf olt, %16, %27 : vector<16x32xf32>
    %31 = arith.select %30, %16, %27 : vector<16x32xi1>, vector<16x32xf32>
    %c2_i32 = arith.constant 2 : i32
    %32 = vector.broadcast %c2_i32 : i32 to vector<16x32xi32>
    %33 = arith.select %30, %32, %29 : vector<16x32xi1>, vector<16x32xi32>
    %34 = arith.cmpf olt, %20, %31 : vector<16x32xf32>
    %35 = arith.select %34, %20, %31 : vector<16x32xi1>, vector<16x32xf32>
    %c3_i32 = arith.constant 3 : i32
    %36 = vector.broadcast %c3_i32 : i32 to vector<16x32xi32>
    %37 = arith.select %34, %36, %33 : vector<16x32xi1>, vector<16x32xi32>
    %38 = arith.cmpf olt, %24, %35 : vector<16x32xf32>
    %39 = arith.select %38, %24, %35 : vector<16x32xi1>, vector<16x32xf32>
    %c4_i32 = arith.constant 4 : i32
    %40 = vector.broadcast %c4_i32 : i32 to vector<16x32xi32>
    %41 = arith.select %38, %40, %37 : vector<16x32xi1>, vector<16x32xi32>
    %c0_i32_5 = arith.constant 0 : i32
    %42 = vector.broadcast %c0_i32_5 : i32 to vector<16x32xi32>
    %43 = arith.cmpi eq, %41, %42 : vector<16x32xi32>
    %44 = arith.extui %43 : vector<16x32xi1> to vector<16x32xi32>
    %45 = arith.sitofp %44 : vector<16x32xi32> to vector<16x32xf32>
    %46 = arith.truncf %45 : vector<16x32xf32> to vector<16x32xbf16>
    %c0_6 = arith.constant 0 : index
    %c0_7 = arith.constant 0 : index
    %c0_8 = arith.constant 0 : index
    %47 = vector.load %arg4[%c0_6, %c0_7, %c0_8] : memref<5x16x32xbf16, #tpu.memory_space<vmem>>, vector<1x16x32xbf16>
    %48 = vector.shape_cast %47 : vector<1x16x32xbf16> to vector<16x32xbf16>
    %49 = vector.shape_cast %46 : vector<16x32xbf16> to vector<1x16x32xbf16>
    tpu.vector_store %arg4[%c0_6, %c0_7, %c0_8], %49 {strides = array<i32>} : memref<5x16x32xbf16, #tpu.memory_space<vmem>>, vector<1x16x32xbf16>,
    %c1_i32_9 = arith.constant 1 : i32
    %50 = vector.broadcast %c1_i32_9 : i32 to vector<16x32xi32>
    %51 = arith.cmpi eq, %41, %50 : vector<16x32xi32>
    %52 = arith.extui %51 : vector<16x32xi1> to vector<16x32xi32>
    %53 = arith.sitofp %52 : vector<16x32xi32> to vector<16x32xf32>
    %54 = arith.truncf %53 : vector<16x32xf32> to vector<16x32xbf16>
    %c1 = arith.constant 1 : index
    %c0_10 = arith.constant 0 : index
    %c0_11 = arith.constant 0 : index
    %55 = vector.load %arg4[%c1, %c0_10, %c0_11] : memref<5x16x32xbf16, #tpu.memory_space<vmem>>, vector<1x16x32xbf16>
    %56 = vector.shape_cast %55 : vector<1x16x32xbf16> to vector<16x32xbf16>
    %57 = vector.shape_cast %54 : vector<16x32xbf16> to vector<1x16x32xbf16>
    tpu.vector_store %arg4[%c1, %c0_10, %c0_11], %57 {strides = array<i32>} : memref<5x16x32xbf16, #tpu.memory_space<vmem>>, vector<1x16x32xbf16>,
    %c2_i32_12 = arith.constant 2 : i32
    %58 = vector.broadcast %c2_i32_12 : i32 to vector<16x32xi32>
    %59 = arith.cmpi eq, %41, %58 : vector<16x32xi32>
    %60 = arith.extui %59 : vector<16x32xi1> to vector<16x32xi32>
    %61 = arith.sitofp %60 : vector<16x32xi32> to vector<16x32xf32>
    %62 = arith.truncf %61 : vector<16x32xf32> to vector<16x32xbf16>
    %c2 = arith.constant 2 : index
    %c0_13 = arith.constant 0 : index
    %c0_14 = arith.constant 0 : index
    %63 = vector.load %arg4[%c2, %c0_13, %c0_14] : memref<5x16x32xbf16, #tpu.memory_space<vmem>>, vector<1x16x32xbf16>
    %64 = vector.shape_cast %63 : vector<1x16x32xbf16> to vector<16x32xbf16>
    %65 = vector.shape_cast %62 : vector<16x32xbf16> to vector<1x16x32xbf16>
    tpu.vector_store %arg4[%c2, %c0_13, %c0_14], %65 {strides = array<i32>} : memref<5x16x32xbf16, #tpu.memory_space<vmem>>, vector<1x16x32xbf16>,
    %c3_i32_15 = arith.constant 3 : i32
    %66 = vector.broadcast %c3_i32_15 : i32 to vector<16x32xi32>
    %67 = arith.cmpi eq, %41, %66 : vector<16x32xi32>
    %68 = arith.extui %67 : vector<16x32xi1> to vector<16x32xi32>
    %69 = arith.sitofp %68 : vector<16x32xi32> to vector<16x32xf32>
    %70 = arith.truncf %69 : vector<16x32xf32> to vector<16x32xbf16>
    %c3 = arith.constant 3 : index
    %c0_16 = arith.constant 0 : index
    %c0_17 = arith.constant 0 : index
    %71 = vector.load %arg4[%c3, %c0_16, %c0_17] : memref<5x16x32xbf16, #tpu.memory_space<vmem>>, vector<1x16x32xbf16>
    %72 = vector.shape_cast %71 : vector<1x16x32xbf16> to vector<16x32xbf16>
    %73 = vector.shape_cast %70 : vector<16x32xbf16> to vector<1x16x32xbf16>
    tpu.vector_store %arg4[%c3, %c0_16, %c0_17], %73 {strides = array<i32>} : memref<5x16x32xbf16, #tpu.memory_space<vmem>>, vector<1x16x32xbf16>,
    %c4_i32_18 = arith.constant 4 : i32
    %74 = vector.broadcast %c4_i32_18 : i32 to vector<16x32xi32>
    %75 = arith.cmpi eq, %41, %74 : vector<16x32xi32>
    %76 = arith.extui %75 : vector<16x32xi1> to vector<16x32xi32>
    %77 = arith.sitofp %76 : vector<16x32xi32> to vector<16x32xf32>
    %78 = arith.truncf %77 : vector<16x32xf32> to vector<16x32xbf16>
    %c4 = arith.constant 4 : index
    %c0_19 = arith.constant 0 : index
    %c0_20 = arith.constant 0 : index
    %79 = vector.load %arg4[%c4, %c0_19, %c0_20] : memref<5x16x32xbf16, #tpu.memory_space<vmem>>, vector<1x16x32xbf16>
    %80 = vector.shape_cast %79 : vector<1x16x32xbf16> to vector<16x32xbf16>
    %81 = vector.shape_cast %78 : vector<16x32xbf16> to vector<1x16x32xbf16>
    tpu.vector_store %arg4[%c4, %c0_19, %c0_20], %81 {strides = array<i32>} : memref<5x16x32xbf16, #tpu.memory_space<vmem>>, vector<1x16x32xbf16>,
    %82 = arith.subf %8, %39 : vector<16x32xf32>
    %cst = arith.constant -1.000000e+03 : f32
    %83 = vector.broadcast %cst : f32 to vector<16x32xf32>
    %84 = arith.mulf %83, %82 : vector<16x32xf32>
    %85 = math.exp %84 : vector<16x32xf32>
    %86 = arith.subf %12, %39 : vector<16x32xf32>
    %cst_21 = arith.constant -1.000000e+03 : f32
    %87 = vector.broadcast %cst_21 : f32 to vector<16x32xf32>
    %88 = arith.mulf %87, %86 : vector<16x32xf32>
    %89 = math.exp %88 : vector<16x32xf32>
    %90 = arith.subf %16, %39 : vector<16x32xf32>
    %cst_22 = arith.constant -1.000000e+03 : f32
    %91 = vector.broadcast %cst_22 : f32 to vector<16x32xf32>
    %92 = arith.mulf %91, %90 : vector<16x32xf32>
    %93 = math.exp %92 : vector<16x32xf32>
    %94 = arith.subf %20, %39 : vector<16x32xf32>
    %cst_23 = arith.constant -1.000000e+03 : f32
    %95 = vector.broadcast %cst_23 : f32 to vector<16x32xf32>
    %96 = arith.mulf %95, %94 : vector<16x32xf32>
    %97 = math.exp %96 : vector<16x32xf32>
    %98 = arith.subf %24, %39 : vector<16x32xf32>
    %cst_24 = arith.constant -1.000000e+03 : f32
    %99 = vector.broadcast %cst_24 : f32 to vector<16x32xf32>
    %100 = arith.mulf %99, %98 : vector<16x32xf32>
    %101 = math.exp %100 : vector<16x32xf32>
    %102 = arith.mulf %8, %85 : vector<16x32xf32>
    %103 = arith.mulf %12, %89 : vector<16x32xf32>
    %104 = arith.addf %102, %103 : vector<16x32xf32>
    %105 = arith.addf %85, %89 : vector<16x32xf32>
    %106 = arith.mulf %16, %93 : vector<16x32xf32>
    %107 = arith.addf %104, %106 : vector<16x32xf32>
    %108 = arith.addf %105, %93 : vector<16x32xf32>
    %109 = arith.mulf %20, %97 : vector<16x32xf32>
    %110 = arith.addf %107, %109 : vector<16x32xf32>
    %111 = arith.addf %108, %97 : vector<16x32xf32>
    %112 = arith.mulf %24, %101 : vector<16x32xf32>
    %113 = arith.addf %110, %112 : vector<16x32xf32>
    %114 = arith.addf %111, %101 : vector<16x32xf32>
    %115 = tpu.reciprocal %114 {approx = true} : vector<16x32xf32> -> vector<16x32xf32>
    %116 = arith.mulf %114, %115 : vector<16x32xf32>
    %cst_25 = arith.constant 2.000000e+00 : f32
    %117 = vector.broadcast %cst_25 : f32 to vector<16x32xf32>
    %118 = arith.subf %117, %116 : vector<16x32xf32>
    %119 = arith.mulf %115, %118 : vector<16x32xf32>
    %120 = arith.mulf %113, %119 : vector<16x32xf32>
    %121 = tpu.iota {dimensions = array<i32: 0>} : vector<16x32xi32>
    %c16_i32 = arith.constant 16 : i32
    %122 = arith.muli %arg1, %c16_i32 : i32
    %123 = vector.broadcast %122 : i32 to vector<16x32xi32>
    %124 = arith.addi %121, %123 : vector<16x32xi32>
    %c24_i32 = arith.constant 24 : i32
    %125 = vector.broadcast %c24_i32 : i32 to vector<16x32xi32>
    %126 = arith.cmpi slt, %124, %125 : vector<16x32xi32>
    %cst_26 = arith.constant 0.000000e+00 : f32
    %127 = vector.broadcast %cst_26 : f32 to vector<16x32xf32>
    %128 = arith.select %126, %120, %127 : vector<16x32xi1>, vector<16x32xf32>
    %c0_27 = arith.constant 0 : index
    %c0_28 = arith.constant 0 : index
    %129 = vector.load %arg5[%c0_27, %c0_28] : memref<1x32xf32, #tpu.memory_space<vmem>>, vector<1x32xf32>
    %cst_29 = arith.constant dense<0.000000e+00> : vector<32xf32>
    %130 = vector.multi_reduction <add>, %128, %cst_29 [0] : vector<16x32xf32> to vector<32xf32>
    %131 = vector.shape_cast %130 : vector<32xf32> to vector<1x32xf32>
    %132 = arith.addf %129, %131 : vector<1x32xf32>
    %c0_30 = arith.constant 0 : index
    %c0_31 = arith.constant 0 : index
    %133 = vector.load %arg5[%c0_30, %c0_31] : memref<1x32xf32, #tpu.memory_space<vmem>>, vector<1x32xf32>
    tpu.vector_store %arg5[%c0_30, %c0_31], %132 {strides = array<i32>} : memref<1x32xf32, #tpu.memory_space<vmem>>, vector<1x32xf32>,
    return
  }
  func.func @transform_0(%arg0: i32, %arg1: i32) -> (i32, i32) {
    %c0_i32 = arith.constant 0 : i32
    return %arg1, %arg0 : i32, i32
  }
  func.func @transform_1(%arg0: i32, %arg1: i32) -> (i32, i32) {
    %c0_i32 = arith.constant 0 : i32
    %c0_i32_0 = arith.constant 0 : i32
    return %c0_i32, %arg0 : i32, i32
  }
  func.func @transform_2(%arg0: i32, %arg1: i32) -> (i32, i32, i32) {
    %c0_i32 = arith.constant 0 : i32
    %c0_i32_0 = arith.constant 0 : i32
    return %c0_i32, %arg1, %arg0 : i32, i32, i32
  }
  func.func @transform_3(%arg0: i32, %arg1: i32) -> (i32, i32) {
    %c0_i32 = arith.constant 0 : i32
    %c0_i32_0 = arith.constant 0 : i32
    return %c0_i32, %arg0 : i32, i32
  }
}

</mosaic_0001>

<llo_original>
// kernel: tpu_custom_call.1
$region0: #{tpu_custom_call.1}
  #allocation0 [shape = 'u32[]', space=smem, size = 0x4, offset = 0x4, fixed_abs, tag = 'smem constant byte address 0x4 - core index']
  #allocation1 [shape = 'u32[144,128]{1,0:T(1,128)}', space=vmem, size = 0x12000, scoped, tag = 'internal scratch']
  #allocation10 [shape = 's32[]', space=sflag, size = 0x4, offset = 0, fixed_abs, tag = 'sflag constant byte address 0x0 - dummy sync flag']
  %s0 = inlined_call_operand.hbm [shape: f32[32,32], index: 0, kind: input, shape index: {}]
  %s1 = inlined_call_operand.hbm [shape: f32[5,32], index: 1, kind: input, shape index: {}]
  %s2 = inlined_call_operand.hbm [shape: bf16[5,32,32], index: 2, kind: output, shape index: {0}]
  %s3 = inlined_call_operand.hbm [shape: f32[1,32], index: 3, kind: output, shape index: {1}]
  %4 = xla_tuple %s2, %s3
  %s5 = sld [smem:[#allocation0]]
  $region61: #{tpu_custom_call.1} parent=0
    _
  %s7 = ssub.s32 1, %s5
  %s8 = scalar_select 0, %s7, %s5
  $region1: #{tpu_custom_call.1} parent=0
    #allocation2 [shape = 'u8[16384]{0}', space=vmem, size = 0x4000, scoped, tag = 'input window, operand 0']
    #allocation3 [shape = 's32[2]{0}', space=sflag, size = 0x8, scoped, tag = 'scoped memory for tpu_custom_call.1']
    #allocation4 [shape = 's32[2]{0}', space=sflag, size = 0x8, scoped, tag = 'scoped memory for tpu_custom_call.1']
    #allocation5 [shape = 'u8[4096]{0}', space=vmem, size = 0x1000, scoped, tag = 'input window, operand 1, single buffered']
    #allocation6 [shape = 's32[1]{0}', space=sflag, size = 0x4, scoped, tag = 'scoped memory for tpu_custom_call.1']
    #allocation7 [shape = 'u8[40960]{0}', space=vmem, size = 0xa000, scoped, tag = 'output window, operand 0']
    #allocation8 [shape = 'u8[512]{0}', space=vmem, size = 0x400, scoped, tag = 'output window, operand 1, single buffered']
    #allocation9 [shape = 's32[1]{0}', space=sflag, size = 0x4, scoped, tag = 'scoped memory for tpu_custom_call.1']
    %9 = vsyncpa [#allocation3], 0
    %s10 = scalar_lea.sflag [#allocation3], 1
    %11 = vsyncpa %s10, 0
    %12 = vsyncpa [#allocation6], 0
    %13 = vsyncpa [#allocation4], 0
    %s14 = scalar_lea.sflag [#allocation4], 1
    %15 = vsyncpa %s14, 0
    %16 = vsyncpa [#allocation9], 0
    loop: start=0, step=1, limit=4
    $region2: #{tpu_custom_call.1} parent=1 // loop_pre_header
      _
    $region3: #{tpu_custom_call.1} parent=1 // loop_header
      %s18 = sphi 0, %s22
      %p19 = scmp.ge.s32.totalorder %s18, 4
      %s25 = sphi 0, %s37
      %s26 = sphi 0, %s33
      %s27 = sphi 0, %s25
      %s28 = sphi 0, %s26
      %s29 = sphi 0, %s27
      %s30 = sphi 0, %s28
      %s42 = sphi 0, %s44
      %s45 = sphi 0, %s42
      %s46 = sphi 0, %s45
      %s62 = sphi 0, %s46
      %s68 = sphi 0, %s70
      %s71 = sphi 0, %s68
      %s72 = sphi 0, %s71
      %s88 = sphi 0, %s72
      %s96 = sphi 0, %s98
      %s99 = sphi 0, %s96
      %s100 = sphi 0, %s99
      %s116 = sphi 0, %s100
      %s122 = sphi 0, %s124
      %s125 = sphi 0, %s122
      %s126 = sphi 0, %s125
      %s142 = sphi 0, %s126
    $region4: #{tpu_custom_call.1} parent=1 // loop_header_branch
      %21 = sbr.rel (%p19) target = $region8
    $region5: #{tpu_custom_call.1} parent=1 // loop_body
      %s23 = ssub.s32 %s18, 1
      %s24 = ssub.s32 %s18, 2
      %s31 = sadd.s32 1, %s26
      %p32 = scmp.ge.s32.totalorder %s31, 2
      %s33 = scalar_select %p32, 0, %s31
      %s34 = sadd.s32 1, %s25
      %s35 = scalar_select %p32, %s34, %s25
      %p36 = scmp.ge.s32.totalorder %s35, 1
      %s37 = scalar_select %p36, 0, %s35
      %s38 = ssub.s32 %s26, %s33
      %s39 = ssub.s32 %s25, %s37
      %s40 = sor.u32 %s38, %s39
      %p41 = scmp.eq.s32.totalorder %s40, 0
      %s43 = sadd.s32 %s42, 1
      %s44 = scalar_select %p41, %s42, %s43
      %p47 = pneg %p41
      %p48 = scmp.eq.s32.totalorder %s18, 1
      %p49 = por %p47, %p48
      %p50 = scmp.ne.s32.totalorder %s42, %s45
      %p51 = scmp.eq.s32.totalorder %s18, 0
      %p52 = por %p50, %p51
      %p53 = scmp.ne.s32.totalorder %s42, %s45
      %p54 = scmp.eq.s32.totalorder %s23, 1
      %p55 = por %p53, %p54
      %p56 = scmp.ne.s32.totalorder %s45, %s46
      %p57 = scmp.eq.s32.totalorder %s23, 0
      %p58 = por %p56, %p57
      %p59 = scmp.ne.s32.totalorder %s45, %s46
      %p60 = scmp.eq.s32.totalorder %s24, 1
      %p61 = por %p59, %p60
      %p63 = scmp.ne.s32.totalorder %s46, %s62
      %p64 = scmp.eq.s32.totalorder %s24, 0
      %p65 = por %p63, %p64
      %s66 = ssub.s32 %s25, %s37
      %p67 = scmp.eq.s32.totalorder %s66, 0
      %s69 = sadd.s32 %s68, 1
      %s70 = scalar_select %p67, %s68, %s69
      %p73 = pneg %p67
      %p74 = scmp.eq.s32.totalorder %s18, 1
      %p75 = por %p73, %p74
      %p76 = scmp.ne.s32.totalorder %s68, %s71
      %p77 = scmp.eq.s32.totalorder %s18, 0
      %p78 = por %p76, %p77
      %p79 = scmp.ne.s32.totalorder %s68, %s71
      %p80 = scmp.eq.s32.totalorder %s23, 1
      %p81 = por %p79, %p80
      %p82 = scmp.ne.s32.totalorder %s71, %s72
      %p83 = scmp.eq.s32.totalorder %s23, 0
      %p84 = por %p82, %p83
      %p85 = scmp.ne.s32.totalorder %s71, %s72
      %p86 = scmp.eq.s32.totalorder %s24, 1
      %p87 = por %p85, %p86
      %p89 = scmp.ne.s32.totalorder %s72, %s88
      %p90 = scmp.eq.s32.totalorder %s24, 0
      %p91 = por %p89, %p90
      %s92 = ssub.s32 %s26, %s33
      %s93 = ssub.s32 %s25, %s37
      %s94 = sor.u32 %s92, %s93
      %p95 = scmp.eq.s32.totalorder %s94, 0
      %s97 = sadd.s32 %s96, 1
      %s98 = scalar_select %p95, %s96, %s97
      %p101 = pneg %p95
      %p102 = scmp.eq.s32.totalorder %s18, 1
      %p103 = por %p101, %p102
      %p104 = scmp.ne.s32.totalorder %s96, %s99
      %p105 = scmp.eq.s32.totalorder %s18, 0
      %p106 = por %p104, %p105
      %p107 = scmp.ne.s32.totalorder %s96, %s99
      %p108 = scmp.eq.s32.totalorder %s23, 1
      %p109 = por %p107, %p108
      %p110 = scmp.ne.s32.totalorder %s99, %s100
      %p111 = scmp.eq.s32.totalorder %s23, 0
      %p112 = por %p110, %p111
      %p113 = scmp.ne.s32.totalorder %s99, %s100
      %p114 = scmp.eq.s32.totalorder %s24, 1
      %p115 = por %p113, %p114
      %p117 = scmp.ne.s32.totalorder %s100, %s116
      %p118 = scmp.eq.s32.totalorder %s24, 0
      %p119 = por %p117, %p118
      %s120 = ssub.s32 %s25, %s37
      %p121 = scmp.eq.s32.totalorder %s120, 0
      %s123 = sadd.s32 %s122, 1
      %s124 = scalar_select %p121, %s122, %s123
      %p127 = pneg %p121
      %p128 = scmp.eq.s32.totalorder %s18, 1
      %p129 = por %p127, %p128
      %p130 = scmp.ne.s32.totalorder %s122, %s125
      %p131 = scmp.eq.s32.totalorder %s18, 0
      %p132 = por %p130, %p131
      %p133 = scmp.ne.s32.totalorder %s122, %s125
      %p134 = scmp.eq.s32.totalorder %s23, 1
      %p135 = por %p133, %p134
      %p136 = scmp.ne.s32.totalorder %s125, %s126
      %p137 = scmp.eq.s32.totalorder %s23, 0
      %p138 = por %p136, %p137
      %p139 = scmp.ne.s32.totalorder %s125, %s126
      %p140 = scmp.eq.s32.totalorder %s24, 1
      %p141 = por %p139, %p140
      %p143 = scmp.ne.s32.totalorder %s126, %s142
      %p144 = scmp.eq.s32.totalorder %s24, 0
      %p145 = por %p143, %p144
      %p146 = scmp.le.s32.totalorder 1, %s18
      %p147 = scmp.lt.s32.totalorder %s18, 3
      %p148 = pnand %p146, %p147
      %p149 = pneg %p148
      // Predicated region
      $region9: #{tpu_custom_call.1} parent=5 // pred_check
        _
      $region10: #{tpu_custom_call.1} parent=5 // pred_check_branch
        %151 = sbr.rel (%p148) target = $region12
      $region11: #{tpu_custom_call.1} parent=5 // pred_region
        %s152 = ssub.s32 %s18, 1
        // Predicated region
        $region13: #{tpu_custom_call.1} parent=11 // pred_check
          %p153 = pneg %p84
        $region14: #{tpu_custom_call.1} parent=11 // pred_check_branch
          %155 = sbr.rel (%p153) target = $region16
        $region15: #{tpu_custom_call.1} parent=11 // pred_region
          %s157 = ssub.s32 128, 128
          %158 = vsyncadd [#allocation6], %s157
          %s159 = smul.addr %s27, 128
          %s160 = scalar_lea.hbm %s1, %s159
          %s162 = sshll.u32 [#allocation5], 4
          %s163 = int_to_ptr.vmem [resolvable:$true] %s162
          %165 = dma.hbm_to_vmem [thread:$0]  %s160, 128, %s163, [#allocation6]
        $region16: #{tpu_custom_call.1} parent=11 // pred_fallthru
          _
      $region12: #{tpu_custom_call.1} parent=5 // pred_fallthru
        _
      %p166 = scmp.lt.s32.totalorder %s18, 2
      // Predicated region
      $region17: #{tpu_custom_call.1} parent=5 // pred_check
        %p167 = pneg %p166
      $region18: #{tpu_custom_call.1} parent=5 // pred_check_branch
        %169 = sbr.rel (%p167) target = $region20
      $region19: #{tpu_custom_call.1} parent=5 // pred_region
        // Predicated region
        $region21: #{tpu_custom_call.1} parent=19 // pred_check
          %p170 = pneg %p52
        $region22: #{tpu_custom_call.1} parent=19 // pred_check_branch
          %172 = sbr.rel (%p170) target = $region24
        $region23: #{tpu_custom_call.1} parent=19 // pred_region
          %s173 = sand.u32 %s42, 1
          %s174 = scalar_lea.sflag [#allocation3], %s173
          %s175 = sand.u32 %s42, 1
          %s176 = smul.addr %s175, 16
          %s177 = scalar_lea.vmem [#allocation2], %s176
          %s178 = smul.u32 2, %s26
          %s180 = ssub.s32 256, 256
          %181 = vsyncadd %s174, %s180
          %s182 = sadd.s32 %s25, %s178
          %s183 = smul.addr %s182, 128
          %s184 = scalar_lea.hbm %s0, %s183
          %s185 = sshll.u32 %s177, 4
          %s186 = int_to_ptr.vmem [resolvable:$true] %s185
          %191 = dma.hbm_to_vmem [thread:$0]  %s184, 256, %s186, %s174, 128, 128, 8
        $region24: #{tpu_custom_call.1} parent=19 // pred_fallthru
          _
      $region20: #{tpu_custom_call.1} parent=5 // pred_fallthru
        _
      %p192 = scmp.le.s32.totalorder 1, %s18
      %p193 = scmp.lt.s32.totalorder %s18, 3
      %p194 = pnand %p192, %p193
      %p195 = pneg %p194
      // Predicated region
      $region25: #{tpu_custom_call.1} parent=5 // pred_check
        _
      $region26: #{tpu_custom_call.1} parent=5 // pred_check_branch
        %197 = sbr.rel (%p194) target = $region28
      $region27: #{tpu_custom_call.1} parent=5 // pred_region
        %s198 = ssub.s32 %s18, 1
        %s199 = sand.u32 %s45, 1
        %s200 = scalar_lea.sflag [#allocation3], %s199
        %s201 = sand.u32 %s45, 1
        %s202 = smul.addr %s201, 16
        %s203 = scalar_lea.vmem [#allocation2], %s202
        // Predicated region
        $region29: #{tpu_custom_call.1} parent=27 // pred_check
          %p204 = pneg %p58
        $region30: #{tpu_custom_call.1} parent=27 // pred_check_branch
          %206 = sbr.rel (%p204) target = $region32
        $region31: #{tpu_custom_call.1} parent=27 // pred_region
          %207 = dma.done %s200, 256
        $region32: #{tpu_custom_call.1} parent=27 // pred_fallthru
          _
        // Predicated region
        $region33: #{tpu_custom_call.1} parent=27 // pred_check
          %p208 = pneg %p84
        $region34: #{tpu_custom_call.1} parent=27 // pred_check_branch
          %210 = sbr.rel (%p208) target = $region36
        $region35: #{tpu_custom_call.1} parent=27 // pred_region
          %211 = dma.done [#allocation6], 128
        $region36: #{tpu_custom_call.1} parent=27 // pred_fallthru
          _
        %s212 = sand.u32 %s45, 1
        %s213 = scalar_lea.sflag [#allocation3], %s212
        %s214 = sand.u32 %s45, 1
        %s215 = smul.addr %s214, 16
        %s216 = scalar_lea.vmem [#allocation2], %s215
        %p217 = pneg %p58
        %p218 = pneg %p55
        %p219 = pneg %p84
        %p220 = pneg %p81
        %p221 = pneg %p112
        %p222 = pneg %p109
        %s223 = sand.u32 %s99, 1
        %s224 = scalar_lea.sflag [#allocation4], %s223
        %s225 = sand.u32 %s99, 1
        %s226 = smul.addr %s225, 40
        %s227 = scalar_lea.vmem [#allocation7], %s226
        %p228 = pneg %p138
        %p229 = pneg %p135
        %s230 = smul.u32 2, %s28
        %s231 = smul.u32 2, %s28
        %p232 = scmp.eq.s32.totalorder %s28, 0
        // Predicated region
        $region37: #{tpu_custom_call.1} parent=27 // pred_check
          %p233 = pneg %p232
        $region38: #{tpu_custom_call.1} parent=27 // pred_check_branch
          %235 = sbr.rel (%p233) target = $region40
        $region39: #{tpu_custom_call.1} parent=27 // pred_region
          %vm236 = vcmask 253952
          %237 = vst.msk [vmem:[#allocation8] sm:$0x1] %vm236, 0.0
        $region40: #{tpu_custom_call.1} parent=27 // pred_fallthru
          _
        %v238 = vld [vmem:[%s203] sm:$0xff]
        %v239 = vld [vmem:[%s203 + $0x8] sm:$0xff]
        %v240 = vld [vmem:[#allocation5] sm:$0x1f]
        %v241 = vlaneseq
        %v242 = vshrl.u32 %v241, 7
        %v243 = vsub.s32 0, %v242
        %v244 = vrot.slane %v240, %v243
        %v245 = vsub.f32 %v238, %v244
        %v246 = vsub.f32 %v239, %v244
        %v247 = vmul.f32 %v245, %v245
        %v248 = vmul.f32 %v246, %v246
        %v249 = vlaneseq
        %v250 = vshrl.u32 %v249, 7
        %v251 = vsub.s32 1, %v250
        %v252 = vrot.slane %v240, %v251
        %v253 = vsub.f32 %v238, %v252
        %v254 = vsub.f32 %v239, %v252
        %v255 = vmul.f32 %v253, %v253
        %v256 = vmul.f32 %v254, %v254
        %v257 = vlaneseq
        %v258 = vshrl.u32 %v257, 7
        %v259 = vsub.s32 2, %v258
        %v260 = vrot.slane %v240, %v259
        %v261 = vsub.f32 %v238, %v260
        %v262 = vsub.f32 %v239, %v260
        %v263 = vmul.f32 %v261, %v261
        %v264 = vmul.f32 %v262, %v262
        %v265 = vlaneseq
        %v266 = vshrl.u32 %v265, 7
        %v267 = vsub.s32 3, %v266
        %v268 = vrot.slane %v240, %v267
        %v269 = vsub.f32 %v238, %v268
        %v270 = vsub.f32 %v239, %v268
        %v271 = vmul.f32 %v269, %v269
        %v272 = vmul.f32 %v270, %v270
        %v273 = vlaneseq
        %v274 = vshrl.u32 %v273, 7
        %v275 = vsub.s32 4, %v274
        %v276 = vrot.slane %v240, %v275
        %v277 = vsub.f32 %v238, %v276
        %v278 = vsub.f32 %v239, %v276
        %v279 = vmul.f32 %v277, %v277
        %v280 = vmul.f32 %v278, %v278
        %vm281 = vcmp.lt.f32.partialorder %v255, %v247
        %vm282 = vcmp.lt.f32.partialorder %v256, %v248
        %v283 = vsel %vm281, %v255, %v247
        %v284 = vsel %vm282, %v256, %v248
        %v285 = vsel %vm281, 1, 0
        %v286 = vsel %vm282, 1, 0
        %vm287 = vcmp.lt.f32.partialorder %v263, %v283
        %vm288 = vcmp.lt.f32.partialorder %v264, %v284
        %v289 = vsel %vm287, %v263, %v283
        %v290 = vsel %vm288, %v264, %v284
        %v291 = vsel %vm287, 2, %v285
        %v292 = vsel %vm288, 2, %v286
        %vm293 = vcmp.lt.f32.partialorder %v271, %v289
        %vm294 = vcmp.lt.f32.partialorder %v272, %v290
        %v295 = vsel %vm293, %v271, %v289
        %v296 = vsel %vm294, %v272, %v290
        %v297 = vsel %vm293, 3, %v291
        %v298 = vsel %vm294, 3, %v292
        %vm299 = vcmp.lt.f32.partialorder %v279, %v295
        %vm300 = vcmp.lt.f32.partialorder %v280, %v296
        %v301 = vsel %vm299, %v279, %v295
        %v302 = vsel %vm300, %v280, %v296
        %v303 = vsel %vm299, 4, %v297
        %v304 = vsel %vm300, 4, %v298
        %vm305 = vcmp.eq.s32.totalorder %v303, 0
        %vm306 = vcmp.eq.s32.totalorder %v304, 0
        %v307 = vsel %vm305, 1, 0
        %v308 = vsel %vm306, 1, 0
        %v309 = vcvt.s32.f32 %v307
        %v310 = vcvt.s32.f32 %v308
        %v311 = vpack.c.bf16 %v310, %v309
        %v313 = vunpack.c.l.b16 %v311
        %v314 = vunpack.c.h.b16 %v311
        %v315 = vpack.c.b16 %v313, %v313
        %v316 = vpack.c.b16 %v314, %v314
        %vm319 = vcmask 257024
        %320 = vst.msk [vmem:[%s227] sm:$0xf] %vm319, %v315
        %321 = vst.msk [vmem:[%s227 + $0x4] sm:$0xf] %vm319, %v316
        %vm322 = vcmp.eq.s32.totalorder %v303, 1
        %vm323 = vcmp.eq.s32.totalorder %v304, 1
        %v324 = vsel %vm322, 1, 0
        %v325 = vsel %vm323, 1, 0
        %v326 = vcvt.s32.f32 %v324
        %v327 = vcvt.s32.f32 %v325
        %v328 = vpack.c.bf16 %v327, %v326
        %v330 = vunpack.c.l.b16 %v328
        %v331 = vunpack.c.h.b16 %v328
        %v332 = vpack.c.b16 %v330, %v330
        %v333 = vpack.c.b16 %v331, %v331
        %s336 = scalar_lea.vmem %s227, 8 [#allocation7]
        %337 = vst.msk [vmem:[%s336] sm:$0xf] %vm319, %v332
        %338 = vst.msk [vmem:[%s336 + $0x4] sm:$0xf] %vm319, %v333
        %vm339 = vcmp.eq.s32.totalorder %v303, 2
        %vm340 = vcmp.eq.s32.totalorder %v304, 2
        %v341 = vsel %vm339, 1, 0
        %v342 = vsel %vm340, 1, 0
        %v343 = vcvt.s32.f32 %v341
        %v344 = vcvt.s32.f32 %v342
        %v345 = vpack.c.bf16 %v344, %v343
        %v347 = vunpack.c.l.b16 %v345
        %v348 = vunpack.c.h.b16 %v345
        %v349 = vpack.c.b16 %v347, %v347
        %v350 = vpack.c.b16 %v348, %v348
        %s353 = scalar_lea.vmem %s227, 16 [#allocation7]
        %354 = vst.msk [vmem:[%s353] sm:$0xf] %vm319, %v349
        %355 = vst.msk [vmem:[%s353 + $0x4] sm:$0xf] %vm319, %v350
        %vm356 = vcmp.eq.s32.totalorder %v303, 3
        %vm357 = vcmp.eq.s32.totalorder %v304, 3
        %v358 = vsel %vm356, 1, 0
        %v359 = vsel %vm357, 1, 0
        %v360 = vcvt.s32.f32 %v358
        %v361 = vcvt.s32.f32 %v359
        %v362 = vpack.c.bf16 %v361, %v360
        %v364 = vunpack.c.l.b16 %v362
        %v365 = vunpack.c.h.b16 %v362
        %v366 = vpack.c.b16 %v364, %v364
        %v367 = vpack.c.b16 %v365, %v365
        %s370 = scalar_lea.vmem %s227, 24 [#allocation7]
        %371 = vst.msk [vmem:[%s370] sm:$0xf] %vm319, %v366
        %372 = vst.msk [vmem:[%s370 + $0x4] sm:$0xf] %vm319, %v367
        %vm373 = vcmp.eq.s32.totalorder %v303, 4
        %vm374 = vcmp.eq.s32.totalorder %v304, 4
        %v375 = vsel %vm373, 1, 0
        %v376 = vsel %vm374, 1, 0
        %v377 = vcvt.s32.f32 %v375
        %v378 = vcvt.s32.f32 %v376
        %v379 = vpack.c.bf16 %v378, %v377
        %v381 = vunpack.c.l.b16 %v379
        %v382 = vunpack.c.h.b16 %v379
        %v383 = vpack.c.b16 %v381, %v381
        %v384 = vpack.c.b16 %v382, %v382
        %s387 = scalar_lea.vmem %s227, 32 [#allocation7]
        %388 = vst.msk [vmem:[%s387] sm:$0xf] %vm319, %v383
        %389 = vst.msk [vmem:[%s387 + $0x4] sm:$0xf] %vm319, %v384
        %v390 = vsub.f32 %v247, %v301
        %v391 = vsub.f32 %v248, %v302
        %v392 = vmul.f32 %v390, -1000.0
        %v393 = vmul.f32 %v391, -1000.0
        %v394 = vmul.f32 %v392, 1.442695
        %v395 = vpow.pop %v394
        %v396 = vmul.f32 %v393, 1.442695
        %v397 = vpow.pop %v396
        %v398 = vsub.f32 %v255, %v301
        %v399 = vsub.f32 %v256, %v302
        %v400 = vmul.f32 %v398, -1000.0
        %v401 = vmul.f32 %v399, -1000.0
        %v402 = vmul.f32 %v400, 1.442695
        %v403 = vpow.pop %v402
        %v404 = vmul.f32 %v401, 1.442695
        %v405 = vpow.pop %v404
        %v406 = vsub.f32 %v263, %v301
        %v407 = vsub.f32 %v264, %v302
        %v408 = vmul.f32 %v406, -1000.0
        %v409 = vmul.f32 %v407, -1000.0
        %v410 = vmul.f32 %v408, 1.442695
        %v411 = vpow.pop %v410
        %v412 = vmul.f32 %v409, 1.442695
        %v413 = vpow.pop %v412
        %v414 = vsub.f32 %v271, %v301
        %v415 = vsub.f32 %v272, %v302
        %v416 = vmul.f32 %v414, -1000.0
        %v417 = vmul.f32 %v415, -1000.0
        %v418 = vmul.f32 %v416, 1.442695
        %v419 = vpow.pop %v418
        %v420 = vmul.f32 %v417, 1.442695
        %v421 = vpow.pop %v420
        %v422 = vsub.f32 %v279, %v301
        %v423 = vsub.f32 %v280, %v302
        %v424 = vmul.f32 %v422, -1000.0
        %v425 = vmul.f32 %v423, -1000.0
        %v426 = vmul.f32 %v424, 1.442695
        %v427 = vpow.pop %v426
        %v428 = vmul.f32 %v425, 1.442695
        %v429 = vpow.pop %v428
        %v430 = vmul.f32 %v247, %v395
        %v431 = vmul.f32 %v248, %v397
        %v432 = vmul.f32 %v255, %v403
        %v433 = vmul.f32 %v256, %v405
        %v434 = vadd.f32 %v430, %v432
        %v435 = vadd.f32 %v431, %v433
        %v436 = vadd.f32 %v395, %v403
        %v437 = vadd.f32 %v397, %v405
        %v438 = vmul.f32 %v263, %v411
        %v439 = vmul.f32 %v264, %v413
        %v440 = vadd.f32 %v434, %v438
        %v441 = vadd.f32 %v435, %v439
        %v442 = vadd.f32 %v436, %v411
        %v443 = vadd.f32 %v437, %v413
        %v444 = vmul.f32 %v271, %v419
        %v445 = vmul.f32 %v272, %v421
        %v446 = vadd.f32 %v440, %v444
        %v447 = vadd.f32 %v441, %v445
        %v448 = vadd.f32 %v442, %v419
        %v449 = vadd.f32 %v443, %v421
        %v450 = vmul.f32 %v279, %v427
        %v451 = vmul.f32 %v280, %v429
        %v452 = vadd.f32 %v446, %v450
        %v453 = vadd.f32 %v447, %v451
        %v454 = vadd.f32 %v448, %v427
        %v455 = vadd.f32 %v449, %v429
        %v456 = vrcp.pop %v454
        %v457 = vrcp.pop %v455
        %v458 = vmul.f32 %v454, %v456
        %v459 = vmul.f32 %v455, %v457
        %v460 = vsub.f32 2.0, %v458
        %v461 = vsub.f32 2.0, %v459
        %v462 = vmul.f32 %v456, %v460
        %v463 = vmul.f32 %v457, %v461
        %v464 = vmul.f32 %v452, %v462
        %v465 = vmul.f32 %v453, %v463
        %v466 = vlaneseq
        %v467 = vshrl.u32 %v466, 7
        %v468 = vadd.s32 %v467, 8
        %s469 = smul.u32 %s28, 16
        %v470 = vstv %s469
        %v471 = vadd.s32 %v467, %v470
        %v472 = vadd.s32 %v468, %v470
        %vm473 = vcmp.lt.s32.totalorder %v471, 24
        %vm474 = vcmp.lt.s32.totalorder %v472, 24
        %v475 = vsel %vm473, %v464, 0.0
        %v476 = vsel %vm474, %v465, 0.0
        %v477 = vld [vmem:[#allocation8] sm:$0x1]
        %vm478 = vcmask 261120
        %v479 = vsel %vm478, %v475, 0.0
        %v480 = vsel %vm478, %v476, 0.0
        %v481 = vadd.f32 %v479, %v480
        %v482 = vrot.slane %v481, 4
        %v483 = vadd.f32 %v481, %v482
        %v484 = vrot.slane %v483, 2
        %v485 = vadd.f32 %v483, %v484
        %v486 = vrot.slane %v485, 1
        %v487 = vadd.f32 %v485, %v486
        %v488 = vadd.f32 %v477, %v487
        %vm489 = vcmask 253952
        %490 = vst.msk [vmem:[#allocation8] sm:$0x1] %vm489, %v488
        %s491 = sand.u32 %s99, 1
        %s492 = scalar_lea.sflag [#allocation4], %s491
        %s493 = sand.u32 %s99, 1
        %s494 = smul.addr %s493, 40
        %s495 = scalar_lea.vmem [#allocation7], %s494
        // Predicated region
        $region41: #{tpu_custom_call.1} parent=27 // pred_check
          %p496 = pneg %p109
        $region42: #{tpu_custom_call.1} parent=27 // pred_check_branch
          %498 = sbr.rel (%p496) target = $region44
        $region43: #{tpu_custom_call.1} parent=27 // pred_region
          #allocation11 [shape = 'u32[6]{0}', space=smem, size = 0x18, scoped, tag = 'DMA stride descriptor']
          %s499 = smul.u32 2, %s28
          %s501 = ssub.s32 640, 640
          %502 = vsyncadd %s492, %s501
          %s503 = sadd.s32 %s27, %s499
          %s504 = smul.addr %s503, 64
          %s505 = scalar_lea.hbm %s2, %s504
          %s507 = sshll.u32 1, 14
          %s508 = sxor.u32 4294967295, %s507
          %s511 = sshll.u32 7, 18
          %s512 = sxor.u32 4294967295, %s511
          %s513 = sand.u32 0, %s512
          %s515 = sor.u32 %s513, 0
          %s517 = sshll.u32 3, 24
          %s518 = sxor.u32 4294967295, %s517
          %s519 = sand.u32 %s515, %s518
          %s521 = sor.u32 %s519, 0
          %s522 = sshll.u32 %s495, 4
          %s523 = int_to_ptr.vmem [resolvable:$true] %s522
          %529 = sst [smem:[#allocation11]] 128
          %s530 = scalar_lea.smem [#allocation11], 1
          %531 = sst [smem:[%s530]] 256
          %s532 = scalar_lea.smem [#allocation11], 2
          %533 = sst [smem:[%s532]] 2
          %s534 = scalar_lea.smem [#allocation11], 3
          %535 = sst [smem:[%s534]] 64
          %s536 = scalar_lea.smem [#allocation11], 4
          %537 = sst [smem:[%s536]] 64
          %s538 = scalar_lea.smem [#allocation11], 5
          %539 = sst [smem:[%s538]] 4
          %541 = dma.general %s523, 640, %s505, %s492, [#allocation10], [#allocation11], %s521, 0
        $region44: #{tpu_custom_call.1} parent=27 // pred_fallthru
          _
        // Predicated region
        $region45: #{tpu_custom_call.1} parent=27 // pred_check
          %p542 = pneg %p135
        $region46: #{tpu_custom_call.1} parent=27 // pred_check_branch
          %544 = sbr.rel (%p542) target = $region48
        $region47: #{tpu_custom_call.1} parent=27 // pred_region
          %s546 = ssub.s32 16, 16
          %547 = vsyncadd [#allocation9], %s546
          %s548 = smul.addr %s27, 16
          %s549 = scalar_lea.hbm %s3, %s548
          %s551 = sshll.u32 [#allocation8], 4
          %s552 = int_to_ptr.vmem [resolvable:$true] %s551
          %554 = dma.vmem_to_hbm [thread:$0]  %s552, 16, %s549, [#allocation9]
        $region48: #{tpu_custom_call.1} parent=27 // pred_fallthru
          _
        // Predicated region
        $region49: #{tpu_custom_call.1} parent=27 // pred_check
          %p555 = pneg %p135
        $region50: #{tpu_custom_call.1} parent=27 // pred_check_branch
          %557 = sbr.rel (%p555) target = $region52
        $region51: #{tpu_custom_call.1} parent=27 // pred_region
          %558 = dma.done [#allocation9], 16
        $region52: #{tpu_custom_call.1} parent=27 // pred_fallthru
          _
      $region28: #{tpu_custom_call.1} parent=5 // pred_fallthru
        _
      %p559 = scmp.le.s32.totalorder 2, %s18
      // Predicated region
      $region53: #{tpu_custom_call.1} parent=5 // pred_check
        %p560 = pneg %p559
      $region54: #{tpu_custom_call.1} parent=5 // pred_check_branch
        %562 = sbr.rel (%p560) target = $region56
      $region55: #{tpu_custom_call.1} parent=5 // pred_region
        %s563 = ssub.s32 %s18, 2
        // Predicated region
        $region57: #{tpu_custom_call.1} parent=55 // pred_check
          %p564 = pneg %p115
        $region58: #{tpu_custom_call.1} parent=55 // pred_check_branch
          %566 = sbr.rel (%p564) target = $region60
        $region59: #{tpu_custom_call.1} parent=55 // pred_region
          %s567 = sand.u32 %s100, 1
          %s568 = scalar_lea.sflag [#allocation4], %s567
          %s569 = sand.u32 %s100, 1
          %s570 = smul.addr %s569, 40
          %s571 = scalar_lea.vmem [#allocation7], %s570
          %572 = dma.done %s568, 640
        $region60: #{tpu_custom_call.1} parent=55 // pred_fallthru
          _
      $region56: #{tpu_custom_call.1} parent=5 // pred_fallthru
        _
    $region6: #{tpu_custom_call.1} parent=1 // loop_footer
      %s22 = sadd.s32 1, %s18
    $region7: #{tpu_custom_call.1} parent=1 // loop_footer_branch
      %17 = sbr.rel target = $region3
    $region8: #{tpu_custom_call.1} parent=1 // loop_exit
      _
    %573 = vsyncpa [#allocation3], 1
    %s574 = scalar_lea.sflag [#allocation3], 1
    %575 = vsyncpa %s574, 1
    %576 = vsyncpa [#allocation6], 1
    %577 = vsyncpa [#allocation4], 1
    %s578 = scalar_lea.sflag [#allocation4], 1
    %579 = vsyncpa %s578, 1
    %580 = vsyncpa [#allocation9], 1

</llo_original>
